<compile_context>
chip_gen: v6e
topology: v6e:2x2x1
jax: 0.10.0
libtpu: 0.0.40
codegen_flags: <defaults>
</compile_context>

<pallas_src>
import functools

import jax
import jax.numpy as jnp
from jax.experimental import pallas as pl
from jax.experimental.pallas import tpu as pltpu

EPS = 1e-5


def _layer_norm_relu(h, mavg, gamma, beta):
    """LayerNorm (+ReLU) over each Dout-lane segment of a packed (T8, 8*Dout) tile.

    `mavg` = kron(I_8, ones(Dout,Dout)/Dout) returns, via the MXU, each segment's
    mean already broadcast back over its lanes.  The mean and second-moment
    matmuls are independent (no pop->VPU->pop chain); var = E[h^2] - mu^2 is the
    biased variance PyTorch LayerNorm uses, eps inside the rsqrt.
    """
    mu = jnp.dot(h, mavg, preferred_element_type=jnp.float32)
    m2 = jnp.dot(h * h, mavg, preferred_element_type=jnp.float32)
    var = m2 - mu * mu
    y = (h - mu) * (jax.lax.rsqrt(var + EPS) * gamma) + beta
    return jnp.maximum(y, 0.0)


def residual_block_kernel(x_ref, wpc_ref, w2_ref, mavg_ref, p_ref, o_ref):
    """One packed tile: x (T8,128) -> out (T8, 8*Dout), everything lane dense."""
    lp = mavg_ref.shape[0]                      # 8 * Dout lanes per packed row

    x = x_ref[...].astype(jnp.float32)          # (T8, 128): 8 rows x Din lanes
    wpc = wpc_ref[...]                          # (128, 2*lp): [proj | fc1∘proj]
    mavg = mavg_ref[...]                        # (lp, lp) block-diag averaging
    p = p_ref[...]                              # (8, 2*lp) packed biases/affine

    bp_b = p[0:1, :lp]
    bc_b = p[0:1, lp:]
    b2_b = p[1:2, :lp]
    g1_b = p[2:3, :lp]
    be1_b = p[3:4, :lp]
    g2_b = p[4:5, :lp]
    be2_b = p[5:6, :lp]

    # fc1(proj(x)) via the folded block-diagonal weight, then LayerNorm + ReLU.
    h = jnp.dot(x, wpc[:, lp:], preferred_element_type=jnp.float32) + bc_b
    h = _layer_norm_relu(h, mavg, g1_b, be1_b)

    # fc2 -> LayerNorm -> ReLU.
    h = jnp.dot(h, w2_ref[...], preferred_element_type=jnp.float32) + b2_b
    h = _layer_norm_relu(h, mavg, g2_b, be2_b)

    # Residual path last (same MXU streaming as a stacked lead matmul, but xp's
    # live range -- and the kernel's VMEM peak -- stays short).
    xp = jnp.dot(x, wpc[:, :lp], preferred_element_type=jnp.float32) + bp_b

    o_ref[...] = (h + xp).astype(o_ref.dtype)


def _tile8(v, pack):
    """Tile a (Dout,) vector across the PACK row-segments of a packed lane row."""
    return jnp.tile(v.astype(jnp.float32), pack)


@functools.partial(jax.jit, static_argnames=("tile_rows", "io_dtype"))
def residual_block(x, params, tile_rows=16384, io_dtype=None):
    """x: (B, N, M, Din) -> (B, N, M, Dout), matching the PyTorch forward.

    io_dtype=jnp.bfloat16 gives the bf16 I/O path (halved x/out HBM traffic,
    recommended for v5e); LayerNorm / accumulation stay f32 either way.
    """
    B, N, M, Din = x.shape
    Dout = params["wp"].shape[0]
    if 128 % Din != 0:
        # TODO(synk): packing factor assumes Din divides 128; other in_dims need
        # a different lane packing (or the D-major slab fallback).
        raise NotImplementedError("packed layout requires in_dims to divide 128")
    pack = 128 // Din                      # original rows per packed lane row (8)
    lp = pack * Dout                       # packed output lanes per row (256)
    out_dtype = jnp.dtype(x.dtype if io_dtype is None else io_dtype)

    # ---- packed views of the activations (free reshapes, no transposes) ------
    R = B * N * M
    rows = x.reshape(R, Din)
    r_fit = pl.cdiv(R, pack) * pack
    if r_fit != R:
        # Rare fallback (R not a multiple of 128/Din): one small pad copy.
        rows = jnp.pad(rows, ((0, r_fit - R), (0, 0)))
    r8 = r_fit // pack
    x_packed = rows.reshape(r8, 128).astype(out_dtype)      # (R/8, 128), lane dense

    # ---- fold / expand the tiny weights (once per call, all f32) -------------
    f32 = lambda a: a.astype(jnp.float32)
    wp, bp = f32(params["wp"]), f32(params["bp"])
    w1, b1 = f32(params["w1"]), f32(params["b1"])
    w2, b2 = f32(params["w2"]), f32(params["b2"])
    wc = w1 @ wp                            # fc1 ∘ proj :  Wc = W1 Wp
    bc = w1 @ bp + b1                       #               bc = W1 bp + b1

    eye = jnp.eye(pack, dtype=jnp.float32)
    # Stacked block-diagonal weights: one operand for [proj | fc1∘proj].
    wpc = jnp.concatenate([jnp.kron(eye, wp.T), jnp.kron(eye, wc.T)], axis=1)
    w2big = jnp.kron(eye, w2.T)                                        # (lp, lp)
    mavg = jnp.kron(eye, jnp.full((Dout, Dout), 1.0 / Dout, jnp.float32))

    # All (Dout,) bias / affine vectors packed into one small operand.
    zrow = jnp.zeros((lp,), jnp.float32)
    paff = jnp.stack([
        jnp.concatenate([_tile8(bp, pack), _tile8(bc, pack)]),   # row 0: bp | bc
        jnp.concatenate([_tile8(b2, pack), zrow]),               # row 1: b2
        jnp.concatenate([_tile8(params["g1"], pack), zrow]),     # row 2: gamma1
        jnp.concatenate([_tile8(params["be1"], pack), zrow]),    # row 3: beta1
        jnp.concatenate([_tile8(params["g2"], pack), zrow]),     # row 4: gamma2
        jnp.concatenate([_tile8(params["be2"], pack), zrow]),    # row 5: beta2
        jnp.zeros((2 * lp,), jnp.float32),                       # pad to 8 rows
        jnp.zeros((2 * lp,), jnp.float32),
    ])

    # ---- tile choice ----------------------------------------------------------
    # Big tiles amortize the ~0.35 us/step pipeline overhead; the cap keeps
    # >= ~8 grid steps for large inputs so v7x's 2 TensorCores both get work,
    # with a floor of ~2048 rows/tile so steps never get tiny.
    t8 = max(16, (int(tile_rows) // pack) // 16 * 16)
    t8_cap = max(16, pl.cdiv(pl.cdiv(r8, 8), 16) * 16)
    t8 = min(t8, max(t8_cap, 256))
    if t8 >= r8:
        t8 = r8                             # single full-extent block
    n_tiles = pl.cdiv(r8, t8)               # last block may be partial; the
                                            # padded rows never mix with valid
                                            # ones and are clipped on writeback.

    out_packed = pl.pallas_call(
        residual_block_kernel,
        out_shape=jax.ShapeDtypeStruct((r8, lp), out_dtype),
        grid_spec=pltpu.PrefetchScalarGridSpec(
            num_scalar_prefetch=0,
            grid=(n_tiles,),
            in_specs=[
                pl.BlockSpec((t8, 128), lambda i: (i, 0)),        # packed x slab
                pl.BlockSpec((128, 2 * lp), lambda i: (0, 0)),    # proj | fc1∘proj
                pl.BlockSpec((lp, lp), lambda i: (0, 0)),         # fc2 (block diag)
                pl.BlockSpec((lp, lp), lambda i: (0, 0)),         # LN averaging mat
                pl.BlockSpec((8, 2 * lp), lambda i: (0, 0)),      # biases / affine
            ],
            out_specs=pl.BlockSpec((t8, lp), lambda i: (i, 0)),
        ),
        compiler_params=pltpu.CompilerParams(
            dimension_semantics=("parallel",),
            vmem_limit_bytes=32 * 1024 * 1024,   # room for 16k-row tiles on v5e
        ),
    )(x_packed, wpc, w2big, mavg, paff)

    out = out_packed.reshape(r_fit, Dout)        # free reshape back to row-major
    if r_fit != R:
        out = out[:R]
    return out.reshape(B, N, M, Dout)


def residual_block_ref(x, params):
    """Pure-JAX reference mirroring the PyTorch forward."""
    def lin(v, w, b):
        return v @ w.T + b

    def ln(v, g, b):
        mu = v.mean(-1, keepdims=True)
        var = ((v - mu) ** 2).mean(-1, keepdims=True)
        return (v - mu) / jnp.sqrt(var + EPS) * g + b

    xp = lin(x, params["wp"], params["bp"])
    h = jax.nn.relu(ln(lin(xp, params["w1"], params["b1"]), params["g1"], params["be1"]))
    h = jax.nn.relu(ln(lin(h, params["w2"], params["b2"]), params["g2"], params["be2"]))
    return h + xp


def init_params(key, in_dims, out_dims):
    ks = jax.random.split(key, 6)
    s_in = 1.0 / jnp.sqrt(in_dims)
    s_out = 1.0 / jnp.sqrt(out_dims)
    return {
        # proj: Linear(in_dims, out_dims)  (PyTorch layout: (out, in))
        "wp": jax.random.uniform(ks[0], (out_dims, in_dims), jnp.float32, -s_in, s_in),
        "bp": jax.random.uniform(ks[1], (out_dims,), jnp.float32, -s_in, s_in),
        # fc1 / fc2: Linear(out_dims, out_dims)
        "w1": jax.random.uniform(ks[2], (out_dims, out_dims), jnp.float32, -s_out, s_out),
        "b1": jax.random.uniform(ks[3], (out_dims,), jnp.float32, -s_out, s_out),
        "w2": jax.random.uniform(ks[4], (out_dims, out_dims), jnp.float32, -s_out, s_out),
        "b2": jax.random.uniform(ks[5], (out_dims,), jnp.float32, -s_out, s_out),
        # LayerNorm affine params (PyTorch init: ones / zeros)
        "g1": jnp.ones((out_dims,), jnp.float32),
        "be1": jnp.zeros((out_dims,), jnp.float32),
        "g2": jnp.ones((out_dims,), jnp.float32),
        "be2": jnp.zeros((out_dims,), jnp.float32),
    }


if __name__ == "__main__":
    key = jax.random.PRNGKey(0)
    k_x, k_p = jax.random.split(key)

    B, N, M = 2, 4, 8
    in_dims, out_dims = 16, 32

    x = jax.random.normal(k_x, (B, N, M, in_dims), jnp.float32)
    params = init_params(k_p, in_dims, out_dims)

    ref = residual_block_ref(x, params)

    # f32 path (default): must match the PyTorch-equivalent reference tightly.
    out = jax.block_until_ready(residual_block(x, params))
    assert out.shape == (B, N, M, out_dims)
    assert jnp.allclose(out, ref, atol=1e-4, rtol=1e-4), \
        float(jnp.max(jnp.abs(out - ref)))

    # bf16 I/O path (review: v5e/v6e HBM lever); loose tolerance, math stays f32.
    out_bf16 = jax.block_until_ready(
        residual_block(x, params, io_dtype=jnp.bfloat16))
    assert out_bf16.shape == (B, N, M, out_dims)
    assert out_bf16.dtype == jnp.bfloat16
    assert jnp.allclose(out_bf16.astype(jnp.float32), ref, atol=2e-1, rtol=1e-1), \
        float(jnp.max(jnp.abs(out_bf16.astype(jnp.float32) - ref)))

    print("KERNEL_OK")
</pallas_src>

<mosaic_0001>
module attributes {stable_mosaic.version = 11 : i64} {
  func.func @residual_block_kernel(%arg0: i32, %arg1: memref<8x128xf32, #tpu.memory_space<vmem>>, %arg2: memref<128x512xf32, #tpu.memory_space<vmem>>, %arg3: memref<256x256xf32, #tpu.memory_space<vmem>>, %arg4: memref<256x256xf32, #tpu.memory_space<vmem>>, %arg5: memref<8x512xf32, #tpu.memory_space<vmem>>, %arg6: memref<8x256xf32, #tpu.memory_space<vmem>>) attributes {dimension_semantics = [#tpu.dimension_semantics<parallel>], iteration_bounds = array<i64: 1>, scalar_prefetch = 0 : i64, scratch_operands = 0 : i64, tpu.core_type = #tpu.core_type<tc>, window_params = [{transform_indices = @transform_0, window_bounds = array<i64: 8, 128>}, {pipeline_mode = #tpu.pipeline_mode<synchronous>, transform_indices = @transform_1, window_bounds = array<i64: 128, 512>}, {pipeline_mode = #tpu.pipeline_mode<synchronous>, transform_indices = @transform_2, window_bounds = array<i64: 256, 256>}, {pipeline_mode = #tpu.pipeline_mode<synchronous>, transform_indices = @transform_3, window_bounds = array<i64: 256, 256>}, {pipeline_mode = #tpu.pipeline_mode<synchronous>, transform_indices = @transform_4, window_bounds = array<i64: 8, 512>}, {transform_indices = @transform_5, window_bounds = array<i64: 8, 256>}]} {
    %c0 = arith.constant 0 : index
    %c0_0 = arith.constant 0 : index
    %0 = vector.load %arg1[%c0, %c0_0] : memref<8x128xf32, #tpu.memory_space<vmem>>, vector<8x128xf32>
    %c0_1 = arith.constant 0 : index
    %c0_2 = arith.constant 0 : index
    %1 = vector.load %arg2[%c0_1, %c0_2] : memref<128x512xf32, #tpu.memory_space<vmem>>, vector<128x512xf32>
    %c0_3 = arith.constant 0 : index
    %c0_4 = arith.constant 0 : index
    %2 = vector.load %arg4[%c0_3, %c0_4] : memref<256x256xf32, #tpu.memory_space<vmem>>, vector<256x256xf32>
    %c0_5 = arith.constant 0 : index
    %c0_6 = arith.constant 0 : index
    %3 = vector.load %arg5[%c0_5, %c0_6] : memref<8x512xf32, #tpu.memory_space<vmem>>, vector<8x512xf32>
    %4 = vector.extract_strided_slice %3 {offsets = [0, 0], sizes = [1, 256], strides = [1, 1]} : vector<8x512xf32> to vector<1x256xf32>
    %5 = vector.extract_strided_slice %3 {offsets = [0, 256], sizes = [1, 256], strides = [1, 1]} : vector<8x512xf32> to vector<1x256xf32>
    %6 = vector.extract_strided_slice %3 {offsets = [1, 0], sizes = [1, 256], strides = [1, 1]} : vector<8x512xf32> to vector<1x256xf32>
    %7 = vector.extract_strided_slice %3 {offsets = [2, 0], sizes = [1, 256], strides = [1, 1]} : vector<8x512xf32> to vector<1x256xf32>
    %8 = vector.extract_strided_slice %3 {offsets = [3, 0], sizes = [1, 256], strides = [1, 1]} : vector<8x512xf32> to vector<1x256xf32>
    %9 = vector.extract_strided_slice %3 {offsets = [4, 0], sizes = [1, 256], strides = [1, 1]} : vector<8x512xf32> to vector<1x256xf32>
    %10 = vector.extract_strided_slice %3 {offsets = [5, 0], sizes = [1, 256], strides = [1, 1]} : vector<8x512xf32> to vector<1x256xf32>
    %11 = vector.extract_strided_slice %1 {offsets = [0, 256], sizes = [128, 256], strides = [1, 1]} : vector<128x512xf32> to vector<128x256xf32>
    %cst = arith.constant dense<0.000000e+00> : vector<8x256xf32>
    %12 = tpu.matmul %0, %11, %cst {dimension_numbers = #tpu.dot_dimension_numbers<[1], [0], [0], [1], [0, 0, 1, 1], [], []>} : vector<8x128xf32>, vector<128x256xf32>, vector<8x256xf32> -> vector<8x256xf32>
    %13 = vector.broadcast %5 : vector<1x256xf32> to vector<8x256xf32>
    %14 = arith.addf %12, %13 : vector<8x256xf32>
    %cst_7 = arith.constant dense<0.000000e+00> : vector<8x256xf32>
    %15 = tpu.matmul %14, %2, %cst_7 {dimension_numbers = #tpu.dot_dimension_numbers<[1], [0], [0], [1], [0, 0, 1, 1], [], []>} : vector<8x256xf32>, vector<256x256xf32>, vector<8x256xf32> -> vector<8x256xf32>
    %16 = arith.mulf %14, %14 : vector<8x256xf32>
    %cst_8 = arith.constant dense<0.000000e+00> : vector<8x256xf32>
    %17 = tpu.matmul %16, %2, %cst_8 {dimension_numbers = #tpu.dot_dimension_numbers<[1], [0], [0], [1], [0, 0, 1, 1], [], []>} : vector<8x256xf32>, vector<256x256xf32>, vector<8x256xf32> -> vector<8x256xf32>
    %18 = arith.mulf %15, %15 : vector<8x256xf32>
    %19 = arith.subf %17, %18 : vector<8x256xf32>
    %20 = arith.subf %14, %15 : vector<8x256xf32>
    %cst_9 = arith.constant 9.99999974E-6 : f32
    %21 = vector.broadcast %cst_9 : f32 to vector<8x256xf32>
    %22 = arith.addf %19, %21 : vector<8x256xf32>
    %23 = math.rsqrt %22 : vector<8x256xf32>
    %24 = vector.broadcast %7 : vector<1x256xf32> to vector<8x256xf32>
    %25 = arith.mulf %23, %24 : vector<8x256xf32>
    %26 = arith.mulf %20, %25 : vector<8x256xf32>
    %27 = vector.broadcast %8 : vector<1x256xf32> to vector<8x256xf32>
    %28 = arith.addf %26, %27 : vector<8x256xf32>
    %cst_10 = arith.constant 0.000000e+00 : f32
    %29 = vector.broadcast %cst_10 : f32 to vector<8x256xf32>
    %30 = arith.maximumf %28, %29 : vector<8x256xf32>
    %c0_11 = arith.constant 0 : index
    %c0_12 = arith.constant 0 : index
    %31 = vector.load %arg3[%c0_11, %c0_12] : memref<256x256xf32, #tpu.memory_space<vmem>>, vector<256x256xf32>
    %cst_13 = arith.constant dense<0.000000e+00> : vector<8x256xf32>
    %32 = tpu.matmul %30, %31, %cst_13 {dimension_numbers = #tpu.dot_dimension_numbers<[1], [0], [0], [1], [0, 0, 1, 1], [], []>} : vector<8x256xf32>, vector<256x256xf32>, vector<8x256xf32> -> vector<8x256xf32>
    %33 = vector.broadcast %6 : vector<1x256xf32> to vector<8x256xf32>
    %34 = arith.addf %32, %33 : vector<8x256xf32>
    %cst_14 = arith.constant dense<0.000000e+00> : vector<8x256xf32>
    %35 = tpu.matmul %34, %2, %cst_14 {dimension_numbers = #tpu.dot_dimension_numbers<[1], [0], [0], [1], [0, 0, 1, 1], [], []>} : vector<8x256xf32>, vector<256x256xf32>, vector<8x256xf32> -> vector<8x256xf32>
    %36 = arith.mulf %34, %34 : vector<8x256xf32>
    %cst_15 = arith.constant dense<0.000000e+00> : vector<8x256xf32>
    %37 = tpu.matmul %36, %2, %cst_15 {dimension_numbers = #tpu.dot_dimension_numbers<[1], [0], [0], [1], [0, 0, 1, 1], [], []>} : vector<8x256xf32>, vector<256x256xf32>, vector<8x256xf32> -> vector<8x256xf32>
    %38 = arith.mulf %35, %35 : vector<8x256xf32>
    %39 = arith.subf %37, %38 : vector<8x256xf32>
    %40 = arith.subf %34, %35 : vector<8x256xf32>
    %cst_16 = arith.constant 9.99999974E-6 : f32
    %41 = vector.broadcast %cst_16 : f32 to vector<8x256xf32>
    %42 = arith.addf %39, %41 : vector<8x256xf32>
    %43 = math.rsqrt %42 : vector<8x256xf32>
    %44 = vector.broadcast %9 : vector<1x256xf32> to vector<8x256xf32>
    %45 = arith.mulf %43, %44 : vector<8x256xf32>
    %46 = arith.mulf %40, %45 : vector<8x256xf32>
    %47 = vector.broadcast %10 : vector<1x256xf32> to vector<8x256xf32>
    %48 = arith.addf %46, %47 : vector<8x256xf32>
    %cst_17 = arith.constant 0.000000e+00 : f32
    %49 = vector.broadcast %cst_17 : f32 to vector<8x256xf32>
    %50 = arith.maximumf %48, %49 : vector<8x256xf32>
    %51 = vector.extract_strided_slice %1 {offsets = [0, 0], sizes = [128, 256], strides = [1, 1]} : vector<128x512xf32> to vector<128x256xf32>
    %cst_18 = arith.constant dense<0.000000e+00> : vector<8x256xf32>
    %52 = tpu.matmul %0, %51, %cst_18 {dimension_numbers = #tpu.dot_dimension_numbers<[1], [0], [0], [1], [0, 0, 1, 1], [], []>} : vector<8x128xf32>, vector<128x256xf32>, vector<8x256xf32> -> vector<8x256xf32>
    %53 = vector.broadcast %4 : vector<1x256xf32> to vector<8x256xf32>
    %54 = arith.addf %52, %53 : vector<8x256xf32>
    %55 = arith.addf %50, %54 : vector<8x256xf32>
    %c0_19 = arith.constant 0 : index
    %c0_20 = arith.constant 0 : index
    %56 = vector.load %arg6[%c0_19, %c0_20] : memref<8x256xf32, #tpu.memory_space<vmem>>, vector<8x256xf32>
    tpu.vector_store %arg6[%c0_19, %c0_20], %55 {strides = array<i32>} : memref<8x256xf32, #tpu.memory_space<vmem>>, vector<8x256xf32>,
    return
  }
  func.func @transform_0(%arg0: i32) -> (i32, i32) {
    %c0_i32 = arith.constant 0 : i32
    %c0_i32_0 = arith.constant 0 : i32
    return %arg0, %c0_i32 : i32, i32
  }
  func.func @transform_1(%arg0: i32) -> (i32, i32) {
    %c0_i32 = arith.constant 0 : i32
    %c0_i32_0 = arith.constant 0 : i32
    %c0_i32_1 = arith.constant 0 : i32
    return %c0_i32, %c0_i32_0 : i32, i32
  }
  func.func @transform_2(%arg0: i32) -> (i32, i32) {
    %c0_i32 = arith.constant 0 : i32
    %c0_i32_0 = arith.constant 0 : i32
    %c0_i32_1 = arith.constant 0 : i32
    return %c0_i32, %c0_i32_0 : i32, i32
  }
  func.func @transform_3(%arg0: i32) -> (i32, i32) {
    %c0_i32 = arith.constant 0 : i32
    %c0_i32_0 = arith.constant 0 : i32
    %c0_i32_1 = arith.constant 0 : i32
    return %c0_i32, %c0_i32_0 : i32, i32
  }
  func.func @transform_4(%arg0: i32) -> (i32, i32) {
    %c0_i32 = arith.constant 0 : i32
    %c0_i32_0 = arith.constant 0 : i32
    %c0_i32_1 = arith.constant 0 : i32
    return %c0_i32, %c0_i32_0 : i32, i32
  }
  func.func @transform_5(%arg0: i32) -> (i32, i32) {
    %c0_i32 = arith.constant 0 : i32
    %c0_i32_0 = arith.constant 0 : i32
    return %arg0, %c0_i32 : i32, i32
  }
}

</mosaic_0001>

<llo_original>
// kernel: tile.43
$region0: #{tile.43}
  #allocation0 [shape = 's32[1]{0}', space=sflag, size = 0x4, scoped, tag = 'scoped memory for tile.43']
  %s0 = inlined_call_operand.vmem [shape: f32[32], index: 0, kind: input, shape index: {}]
  %s1 = inlined_call_operand.vmem [shape: f32[8,32], index: 1, kind: output, shape index: {}]
  // Predicated region
  $region2: #{tile.43} parent=0 // pred_check
    _
  $region3: #{tile.43} parent=0 // pred_check_branch
    %3 = sbr.rel (0) target = $region5
  $region4: #{tile.43} parent=0 // pred_region
    _
  $region5: #{tile.43} parent=0 // pred_fallthru
    _
  %v4 = vld [vmem:[%s0] ss:$0 sm:$0xff]
  %5 = vst [vmem:[%s1] sm:$0xff] %v4

// kernel: tile.44
$region0: #{tile.44}
  %s0 = inlined_call_operand.vmem [shape: f32[8,32], index: 0, kind: input, shape index: {}]
  %s1 = inlined_call_operand.vmem [shape: f32[256], index: 1, kind: output, shape index: {}]
  $region1: #{tile.44} parent=0
    #allocation0 [shape = 'u8[4096]{0}', space=vmem, size = 0x1000, scoped, tag = 'scoped mem for output reshape']
    %s2 = smov 3
    %v3 = vld [vmem:[%s0] ss:$4 sm:%s2]
    %vm4 = vcmask 261120
    %5 = vst.msk [vmem:[#allocation0] sm:$0x3] %vm4, %v3
    %s6 = scalar_lea.vmem %s0, 3
    %s7 = smov 3
    %v8 = vld [vmem:[%s6] ss:$4 sm:%s7]
    %9 = vrot.lane.b32.xlu0 %v8, 96
    %v10 = vpop.permute.xlu0 %9
    %vm11 = vcmask 1048320
    %12 = vst.msk [vmem:[#allocation0] sm:$0x3] %vm11, %v10
    %s13 = scalar_lea.vmem %s0, 2
    %s14 = smov 3
    %v15 = vld [vmem:[%s13] ss:$4 sm:%s14]
    %16 = vrot.lane.b32.xlu0 %v15, 64
    %v17 = vpop.permute.xlu0 %16
    %vm18 = vcmask 785920
    %19 = vst.msk [vmem:[#allocation0] sm:$0x3] %vm18, %v17
    %s20 = scalar_lea.vmem %s0, 1
    %s21 = smov 3
    %v22 = vld [vmem:[%s20] ss:$4 sm:%s21]
    %23 = vrot.lane.b32.xlu0 %v22, 32
    %v24 = vpop.permute.xlu0 %23
    %vm25 = vcmask 523520
    %26 = vst.msk [vmem:[#allocation0] sm:$0x3] %vm25, %v24
    %s28 = sshll.u32 1, 2
    %s29 = ssub.s32 %s28, 1
    %v31 = vld [vmem:[#allocation0] sm:%s29]
    %s32 = sshll.u32 1, 2
    %s33 = ssub.s32 %s32, 1
    %34 = vst [vmem:[%s1] sm:%s33] %v31

// kernel: residual_block.1
$region0: #{residual_block.1}
  #allocation0 [shape = 'u32[]', space=smem, size = 0x4, offset = 0x4, fixed_abs, tag = 'smem constant byte address 0x4 - core index']
  #allocation1 [shape = 'u32[144,128]{1,0:T(1,128)}', space=vmem, size = 0x12000, scoped, tag = 'internal scratch']
  %s0 = inlined_call_operand.vmem [shape: f32[8,128], index: 0, kind: input, shape index: {}]
  %s1 = inlined_call_operand.vmem [shape: f32[128,512], index: 1, kind: input, shape index: {}]
  %s2 = inlined_call_operand.vmem [shape: f32[256,256], index: 2, kind: input, shape index: {}]
  %s3 = inlined_call_operand.vmem [shape: f32[256,256], index: 3, kind: input, shape index: {}]
  %s4 = inlined_call_operand.vmem [shape: f32[8,512], index: 4, kind: input, shape index: {}]
  %s5 = inlined_call_operand.vmem [shape: f32[8,256], index: 5, kind: output, shape index: {}]
  %s6 = sld [smem:[#allocation0]]
  $region30: #{residual_block.1} parent=0
    _
  %s8 = ssub.s32 1, %s6
  %s9 = scalar_select 0, %s8, %s6
  // Predicated region
  $region2: #{residual_block.1} parent=0 // pred_check
    _
  $region3: #{residual_block.1} parent=0 // pred_check_branch
    %11 = sbr.rel (0) target = $region5
  $region4: #{residual_block.1} parent=0 // pred_region
    _
  $region5: #{residual_block.1} parent=0 // pred_fallthru
    _
  // Predicated region
  $region6: #{residual_block.1} parent=0 // pred_check
    _
  $region7: #{residual_block.1} parent=0 // pred_check_branch
    %13 = sbr.rel (0) target = $region9
  $region8: #{residual_block.1} parent=0 // pred_region
    _
  $region9: #{residual_block.1} parent=0 // pred_fallthru
    _
  // Predicated region
  $region10: #{residual_block.1} parent=0 // pred_check
    _
  $region11: #{residual_block.1} parent=0 // pred_check_branch
    %15 = sbr.rel (0) target = $region13
  $region12: #{residual_block.1} parent=0 // pred_region
    _
  $region13: #{residual_block.1} parent=0 // pred_fallthru
    _
  // Predicated region
  $region14: #{residual_block.1} parent=0 // pred_check
    _
  $region15: #{residual_block.1} parent=0 // pred_check_branch
    %17 = sbr.rel (0) target = $region17
  $region16: #{residual_block.1} parent=0 // pred_region
    _
  $region17: #{residual_block.1} parent=0 // pred_fallthru
    _
  // Predicated region
  $region18: #{residual_block.1} parent=0 // pred_check
    _
  $region19: #{residual_block.1} parent=0 // pred_check_branch
    %19 = sbr.rel (0) target = $region21
  $region20: #{residual_block.1} parent=0 // pred_region
    _
  $region21: #{residual_block.1} parent=0 // pred_fallthru
    _
  %v20 = vld [vmem:[%s0] sm:$0xff]
  %v21 = vld [vmem:[%s1] sm:$0xff]
  %v22 = vld [vmem:[%s1 + $0x8] sm:$0xff]
  %v23 = vld [vmem:[%s1 + $0x10] sm:$0xff]
  %v24 = vld [vmem:[%s1 + $0x18] sm:$0xff]
  %v25 = vld [vmem:[%s1 + $0x20] sm:$0xff]
  %v26 = vld [vmem:[%s1 + $0x28] sm:$0xff]
  %v27 = vld [vmem:[%s1 + $0x30] sm:$0xff]
  %v28 = vld [vmem:[%s1 + $0x38] sm:$0xff]
  %v29 = vld [vmem:[%s1 + $0x40] sm:$0xff]
  %v30 = vld [vmem:[%s1 + $0x48] sm:$0xff]
  %v31 = vld [vmem:[%s1 + $0x50] sm:$0xff]
  %v32 = vld [vmem:[%s1 + $0x58] sm:$0xff]
  %v33 = vld [vmem:[%s1 + $0x60] sm:$0xff]
  %v34 = vld [vmem:[%s1 + $0x68] sm:$0xff]
  %v35 = vld [vmem:[%s1 + $0x70] sm:$0xff]
  %v36 = vld [vmem:[%s1 + $0x78] sm:$0xff]
  %v37 = vld [vmem:[%s1 + $0x80] sm:$0xff]
  %v38 = vld [vmem:[%s1 + $0x88] sm:$0xff]
  %v39 = vld [vmem:[%s1 + $0x90] sm:$0xff]
  %v40 = vld [vmem:[%s1 + $0x98] sm:$0xff]
  %v41 = vld [vmem:[%s1 + $0xa0] sm:$0xff]
  %v42 = vld [vmem:[%s1 + $0xa8] sm:$0xff]
  %v43 = vld [vmem:[%s1 + $0xb0] sm:$0xff]
  %v44 = vld [vmem:[%s1 + $0xb8] sm:$0xff]
  %v45 = vld [vmem:[%s1 + $0xc0] sm:$0xff]
  %v46 = vld [vmem:[%s1 + $0xc8] sm:$0xff]
  %v47 = vld [vmem:[%s1 + $0xd0] sm:$0xff]
  %v48 = vld [vmem:[%s1 + $0xd8] sm:$0xff]
  %v49 = vld [vmem:[%s1 + $0xe0] sm:$0xff]
  %v50 = vld [vmem:[%s1 + $0xe8] sm:$0xff]
  %v51 = vld [vmem:[%s1 + $0xf0] sm:$0xff]
  %v52 = vld [vmem:[%s1 + $0xf8] sm:$0xff]
  %v53 = vld [vmem:[%s1 + $0x100] sm:$0xff]
  %v54 = vld [vmem:[%s1 + $0x108] sm:$0xff]
  %v55 = vld [vmem:[%s1 + $0x110] sm:$0xff]
  %v56 = vld [vmem:[%s1 + $0x118] sm:$0xff]
  %v57 = vld [vmem:[%s1 + $0x120] sm:$0xff]
  %v58 = vld [vmem:[%s1 + $0x128] sm:$0xff]
  %v59 = vld [vmem:[%s1 + $0x130] sm:$0xff]
  %v60 = vld [vmem:[%s1 + $0x138] sm:$0xff]
  %v61 = vld [vmem:[%s1 + $0x140] sm:$0xff]
  %v62 = vld [vmem:[%s1 + $0x148] sm:$0xff]
  %v63 = vld [vmem:[%s1 + $0x150] sm:$0xff]
  %v64 = vld [vmem:[%s1 + $0x158] sm:$0xff]
  %v65 = vld [vmem:[%s1 + $0x160] sm:$0xff]
  %v66 = vld [vmem:[%s1 + $0x168] sm:$0xff]
  %v67 = vld [vmem:[%s1 + $0x170] sm:$0xff]
  %v68 = vld [vmem:[%s1 + $0x178] sm:$0xff]
  %v69 = vld [vmem:[%s1 + $0x180] sm:$0xff]
  %v70 = vld [vmem:[%s1 + $0x188] sm:$0xff]
  %v71 = vld [vmem:[%s1 + $0x190] sm:$0xff]
  %v72 = vld [vmem:[%s1 + $0x198] sm:$0xff]
  %v73 = vld [vmem:[%s1 + $0x1a0] sm:$0xff]
  %v74 = vld [vmem:[%s1 + $0x1a8] sm:$0xff]
  %v75 = vld [vmem:[%s1 + $0x1b0] sm:$0xff]
  %v76 = vld [vmem:[%s1 + $0x1b8] sm:$0xff]
  %v77 = vld [vmem:[%s1 + $0x1c0] sm:$0xff]
  %v78 = vld [vmem:[%s1 + $0x1c8] sm:$0xff]
  %v79 = vld [vmem:[%s1 + $0x1d0] sm:$0xff]
  %v80 = vld [vmem:[%s1 + $0x1d8] sm:$0xff]
  %v81 = vld [vmem:[%s1 + $0x1e0] sm:$0xff]
  %v82 = vld [vmem:[%s1 + $0x1e8] sm:$0xff]
  %v83 = vld [vmem:[%s1 + $0x1f0] sm:$0xff]
  %v84 = vld [vmem:[%s1 + $0x1f8] sm:$0xff]
  %v85 = vld [vmem:[%s3] sm:$0xff]
  %v86 = vld [vmem:[%s3 + $0x8] sm:$0xff]
  %v87 = vld [vmem:[%s3 + $0x10] sm:$0xff]
  %v88 = vld [vmem:[%s3 + $0x18] sm:$0xff]
  %v89 = vld [vmem:[%s3 + $0x20] sm:$0xff]
  %v90 = vld [vmem:[%s3 + $0x28] sm:$0xff]
  %v91 = vld [vmem:[%s3 + $0x30] sm:$0xff]
  %v92 = vld [vmem:[%s3 + $0x38] sm:$0xff]
  %v93 = vld [vmem:[%s3 + $0x40] sm:$0xff]
  %v94 = vld [vmem:[%s3 + $0x48] sm:$0xff]
  %v95 = vld [vmem:[%s3 + $0x50] sm:$0xff]
  %v96 = vld [vmem:[%s3 + $0x58] sm:$0xff]
  %v97 = vld [vmem:[%s3 + $0x60] sm:$0xff]
  %v98 = vld [vmem:[%s3 + $0x68] sm:$0xff]
  %v99 = vld [vmem:[%s3 + $0x70] sm:$0xff]
  %v100 = vld [vmem:[%s3 + $0x78] sm:$0xff]
  %v101 = vld [vmem:[%s3 + $0x80] sm:$0xff]
  %v102 = vld [vmem:[%s3 + $0x88] sm:$0xff]
  %v103 = vld [vmem:[%s3 + $0x90] sm:$0xff]
  %v104 = vld [vmem:[%s3 + $0x98] sm:$0xff]
  %v105 = vld [vmem:[%s3 + $0xa0] sm:$0xff]
  %v106 = vld [vmem:[%s3 + $0xa8] sm:$0xff]
  %v107 = vld [vmem:[%s3 + $0xb0] sm:$0xff]
  %v108 = vld [vmem:[%s3 + $0xb8] sm:$0xff]
  %v109 = vld [vmem:[%s3 + $0xc0] sm:$0xff]
  %v110 = vld [vmem:[%s3 + $0xc8] sm:$0xff]
  %v111 = vld [vmem:[%s3 + $0xd0] sm:$0xff]
  %v112 = vld [vmem:[%s3 + $0xd8] sm:$0xff]
  %v113 = vld [vmem:[%s3 + $0xe0] sm:$0xff]
  %v114 = vld [vmem:[%s3 + $0xe8] sm:$0xff]
  %v115 = vld [vmem:[%s3 + $0xf0] sm:$0xff]
  %v116 = vld [vmem:[%s3 + $0xf8] sm:$0xff]
  %v117 = vld [vmem:[%s3 + $0x100] sm:$0xff]
  %v118 = vld [vmem:[%s3 + $0x108] sm:$0xff]
  %v119 = vld [vmem:[%s3 + $0x110] sm:$0xff]
  %v120 = vld [vmem:[%s3 + $0x118] sm:$0xff]
  %v121 = vld [vmem:[%s3 + $0x120] sm:$0xff]
  %v122 = vld [vmem:[%s3 + $0x128] sm:$0xff]
  %v123 = vld [vmem:[%s3 + $0x130] sm:$0xff]
  %v124 = vld [vmem:[%s3 + $0x138] sm:$0xff]
  %v125 = vld [vmem:[%s3 + $0x140] sm:$0xff]
  %v126 = vld [vmem:[%s3 + $0x148] sm:$0xff]
  %v127 = vld [vmem:[%s3 + $0x150] sm:$0xff]
  %v128 = vld [vmem:[%s3 + $0x158] sm:$0xff]
  %v129 = vld [vmem:[%s3 + $0x160] sm:$0xff]
  %v130 = vld [vmem:[%s3 + $0x168] sm:$0xff]
  %v131 = vld [vmem:[%s3 + $0x170] sm:$0xff]
  %v132 = vld [vmem:[%s3 + $0x178] sm:$0xff]
  %v133 = vld [vmem:[%s3 + $0x180] sm:$0xff]
  %v134 = vld [vmem:[%s3 + $0x188] sm:$0xff]
  %v135 = vld [vmem:[%s3 + $0x190] sm:$0xff]
  %v136 = vld [vmem:[%s3 + $0x198] sm:$0xff]
  %v137 = vld [vmem:[%s3 + $0x1a0] sm:$0xff]
  %v138 = vld [vmem:[%s3 + $0x1a8] sm:$0xff]
  %v139 = vld [vmem:[%s3 + $0x1b0] sm:$0xff]
  %v140 = vld [vmem:[%s3 + $0x1b8] sm:$0xff]
  %v141 = vld [vmem:[%s3 + $0x1c0] sm:$0xff]
  %v142 = vld [vmem:[%s3 + $0x1c8] sm:$0xff]
  %v143 = vld [vmem:[%s3 + $0x1d0] sm:$0xff]
  %v144 = vld [vmem:[%s3 + $0x1d8] sm:$0xff]
  %v145 = vld [vmem:[%s3 + $0x1e0] sm:$0xff]
  %v146 = vld [vmem:[%s3 + $0x1e8] sm:$0xff]
  %v147 = vld [vmem:[%s3 + $0x1f0] sm:$0xff]
  %v148 = vld [vmem:[%s3 + $0x1f8] sm:$0xff]
  %v149 = vld [vmem:[%s4] sm:$0xff]
  %v150 = vld [vmem:[%s4 + $0x8] sm:$0xff]
  %v151 = vld [vmem:[%s4 + $0x10] sm:$0xff]
  %v152 = vld [vmem:[%s4 + $0x18] sm:$0xff]
  %v153 = vlaneseq
  %v154 = vshrl.u32 %v153, 7
  %v155 = vsub.s32 0, %v154
  %v156 = vrot.slane %v151, %v155
  %v157 = vlaneseq
  %v158 = vshrl.u32 %v157, 7
  %v159 = vsub.s32 0, %v158
  %v160 = vrot.slane %v152, %v159
  %161 = vmatprep.subr.mxu0 %v84
  %162 = vmatpush1.msra.mxu0 %v83
  %163 = vmatprep.subr.mxu0 %v80
  %164 = vmatpush1.msra.mxu0 %v79
  %165 = vmatprep.subr.mxu0 %v76
  %166 = vmatpush1.msra.mxu0 %v75
  %167 = vmatprep.subr.mxu0 %v72
  %168 = vmatpush1.msra.mxu0 %v71
  %169 = vmatprep.subr.mxu0 %v68
  %170 = vmatpush1.msra.mxu0 %v67
  %171 = vmatprep.subr.mxu0 %v64
  %172 = vmatpush1.msra.mxu0 %v63
  %173 = vmatprep.subr.mxu0 %v60
  %174 = vmatpush1.msra.mxu0 %v59
  %175 = vmatprep.subr.mxu0 %v56
  %176 = vmatpush1.msra.mxu0 %v55
  %177 = vmatprep.subr.mxu0 %v52
  %178 = vmatpush1.msra.mxu0 %v51
  %179 = vmatprep.subr.mxu0 %v48
  %180 = vmatpush1.msra.mxu0 %v47
  %181 = vmatprep.subr.mxu0 %v44
  %182 = vmatpush1.msra.mxu0 %v43
  %183 = vmatprep.subr.mxu0 %v40
  %184 = vmatpush1.msra.mxu0 %v39
  %185 = vmatprep.subr.mxu0 %v36
  %186 = vmatpush1.msra.mxu0 %v35
  %187 = vmatprep.subr.mxu0 %v32
  %188 = vmatpush1.msra.mxu0 %v31
  %189 = vmatprep.subr.mxu0 %v28
  %190 = vmatpush1.msra.mxu0 %v27
  %191 = vmatprep.subr.mxu0 %v24
  %192 = vmatpush1.msra.mxu0 %v23
  %193 = vmatprep.subr.mxu0 0.0
  %194 = vmatpush2.msra.mxu0 0.0
  %195 = vmatprep.subr.mxu0 0.0
  %196 = vmatpush2.msra.mxu0 0.0
  %197 = vmatprep.subr.mxu0 0.0
  %198 = vmatpush2.msra.mxu0 0.0
  %199 = vmatprep.subr.mxu0 0.0
  %200 = vmatpush2.msra.mxu0 0.0
  %201 = vmatprep.subr.mxu0 0.0
  %202 = vmatpush2.msra.mxu0 0.0
  %203 = vmatprep.subr.mxu0 0.0
  %204 = vmatpush2.msra.mxu0 0.0
  %205 = vmatprep.subr.mxu0 0.0
  %206 = vmatpush2.msra.mxu0 0.0
  %207 = vmatprep.subr.mxu0 0.0
  %208 = vmatpush2.msra.mxu0 0.0
  %209 = vmatprep.subr.mxu0 0.0
  %210 = vmatpush2.msra.mxu0 0.0
  %211 = vmatprep.subr.mxu0 0.0
  %212 = vmatpush2.msra.mxu0 0.0
  %213 = vmatprep.subr.mxu0 0.0
  %214 = vmatpush2.msra.mxu0 0.0
  %215 = vmatprep.subr.mxu0 0.0
  %216 = vmatpush2.msra.mxu0 0.0
  %217 = vmatprep.subr.mxu0 0.0
  %218 = vmatpush2.msra.mxu0 0.0
  %219 = vmatprep.subr.mxu0 0.0
  %220 = vmatpush2.msra.mxu0 0.0
  %221 = vmatprep.subr.mxu0 0.0
  %222 = vmatpush2.msra.mxu0 0.0
  %223 = vmatprep.subr.mxu0 0.0
  %224 = vmatpush2.msra.mxu0 0.0
  %225 = vmatprep.mubr.f32.mxu0 0.0
  %226 = vmatmul.mubr.f32.gmra.mxu0 %v20
  %v227 = vpop.f32.mrf.mxu0
  %v228 = vadd.f32 %v156, %v227
  %v229 = vpop.f32.mrf.mxu0
  %v230 = vadd.f32 %v160, %v229
  %231 = vdwg.mxu0
  %232 = vmatprep.subr.mxu0 %v116
  %233 = vmatpush1.msra.mxu0 %v115
  %234 = vmatprep.subr.mxu0 %v114
  %235 = vmatpush1.msra.mxu0 %v113
  %236 = vmatprep.subr.mxu0 %v112
  %237 = vmatpush1.msra.mxu0 %v111
  %238 = vmatprep.subr.mxu0 %v110
  %239 = vmatpush1.msra.mxu0 %v109
  %240 = vmatprep.subr.mxu0 %v108
  %241 = vmatpush1.msra.mxu0 %v107
  %242 = vmatprep.subr.mxu0 %v106
  %243 = vmatpush1.msra.mxu0 %v105
  %244 = vmatprep.subr.mxu0 %v104
  %245 = vmatpush1.msra.mxu0 %v103
  %246 = vmatprep.subr.mxu0 %v102
  %247 = vmatpush1.msra.mxu0 %v101
  %248 = vmatprep.subr.mxu0 %v100
  %249 = vmatpush1.msra.mxu0 %v99
  %250 = vmatprep.subr.mxu0 %v98
  %251 = vmatpush1.msra.mxu0 %v97
  %252 = vmatprep.subr.mxu0 %v96
  %253 = vmatpush1.msra.mxu0 %v95
  %254 = vmatprep.subr.mxu0 %v94
  %255 = vmatpush1.msra.mxu0 %v93
  %256 = vmatprep.subr.mxu0 %v92
  %257 = vmatpush1.msra.mxu0 %v91
  %258 = vmatprep.subr.mxu0 %v90
  %259 = vmatpush1.msra.mxu0 %v89
  %260 = vmatprep.subr.mxu0 %v88
  %261 = vmatpush1.msra.mxu0 %v87
  %262 = vmatprep.subr.mxu0 %v86
  %263 = vmatpush1.msra.mxu0 %v85
  %264 = vmatprep.subr.mxu0 %v148
  %265 = vmatpush2.msra.mxu0 %v147
  %266 = vmatprep.subr.mxu0 %v146
  %267 = vmatpush2.msra.mxu0 %v145
  %268 = vmatprep.subr.mxu0 %v144
  %269 = vmatpush2.msra.mxu0 %v143
  %270 = vmatprep.subr.mxu0 %v142
  %271 = vmatpush2.msra.mxu0 %v141
  %272 = vmatprep.subr.mxu0 %v140
  %273 = vmatpush2.msra.mxu0 %v139
  %274 = vmatprep.subr.mxu0 %v138
  %275 = vmatpush2.msra.mxu0 %v137
  %276 = vmatprep.subr.mxu0 %v136
  %277 = vmatpush2.msra.mxu0 %v135
  %278 = vmatprep.subr.mxu0 %v134
  %279 = vmatpush2.msra.mxu0 %v133
  %280 = vmatprep.subr.mxu0 %v132
  %281 = vmatpush2.msra.mxu0 %v131
  %282 = vmatprep.subr.mxu0 %v130
  %283 = vmatpush2.msra.mxu0 %v129
  %284 = vmatprep.subr.mxu0 %v128
  %285 = vmatpush2.msra.mxu0 %v127
  %286 = vmatprep.subr.mxu0 %v126
  %287 = vmatpush2.msra.mxu0 %v125
  %288 = vmatprep.subr.mxu0 %v124
  %289 = vmatpush2.msra.mxu0 %v123
  %290 = vmatprep.subr.mxu0 %v122
  %291 = vmatpush2.msra.mxu0 %v121
  %292 = vmatprep.subr.mxu0 %v120
  %293 = vmatpush2.msra.mxu0 %v119
  %294 = vmatprep.subr.mxu0 %v118
  %295 = vmatpush2.msra.mxu0 %v117
  %296 = vmatprep.mubr.f32.mxu0 %v230
  %297 = vmatmul.mubr.f32.gmra.mxu0 %v228
  %v298 = vpop.f32.mrf.mxu0
  %v299 = vadd.f32 0.0, %v298
  %v300 = vpop.f32.mrf.mxu0
  %v301 = vadd.f32 0.0, %v300
  %302 = vdwg.mxu0
  %v303 = vmul.f32 %v228, %v228
  %v304 = vmul.f32 %v230, %v230
  %305 = vmatprep.subr.mxu0 %v116
  %306 = vmatpush1.msra.mxu0 %v115
  %307 = vmatprep.subr.mxu0 %v114
  %308 = vmatpush1.msra.mxu0 %v113
  %309 = vmatprep.subr.mxu0 %v112
  %310 = vmatpush1.msra.mxu0 %v111
  %311 = vmatprep.subr.mxu0 %v110
  %312 = vmatpush1.msra.mxu0 %v109
  %313 = vmatprep.subr.mxu0 %v108
  %314 = vmatpush1.msra.mxu0 %v107
  %315 = vmatprep.subr.mxu0 %v106
  %316 = vmatpush1.msra.mxu0 %v105
  %317 = vmatprep.subr.mxu0 %v104
  %318 = vmatpush1.msra.mxu0 %v103
  %319 = vmatprep.subr.mxu0 %v102
  %320 = vmatpush1.msra.mxu0 %v101
  %321 = vmatprep.subr.mxu0 %v100
  %322 = vmatpush1.msra.mxu0 %v99
  %323 = vmatprep.subr.mxu0 %v98
  %324 = vmatpush1.msra.mxu0 %v97
  %325 = vmatprep.subr.mxu0 %v96
  %326 = vmatpush1.msra.mxu0 %v95
  %327 = vmatprep.subr.mxu0 %v94
  %328 = vmatpush1.msra.mxu0 %v93
  %329 = vmatprep.subr.mxu0 %v92
  %330 = vmatpush1.msra.mxu0 %v91
  %331 = vmatprep.subr.mxu0 %v90
  %332 = vmatpush1.msra.mxu0 %v89
  %333 = vmatprep.subr.mxu0 %v88
  %334 = vmatpush1.msra.mxu0 %v87
  %335 = vmatprep.subr.mxu0 %v86
  %336 = vmatpush1.msra.mxu0 %v85
  %337 = vmatprep.subr.mxu0 %v148
  %338 = vmatpush2.msra.mxu0 %v147
  %339 = vmatprep.subr.mxu0 %v146
  %340 = vmatpush2.msra.mxu0 %v145
  %341 = vmatprep.subr.mxu0 %v144
  %342 = vmatpush2.msra.mxu0 %v143
  %343 = vmatprep.subr.mxu0 %v142
  %344 = vmatpush2.msra.mxu0 %v141
  %345 = vmatprep.subr.mxu0 %v140
  %346 = vmatpush2.msra.mxu0 %v139
  %347 = vmatprep.subr.mxu0 %v138
  %348 = vmatpush2.msra.mxu0 %v137
  %349 = vmatprep.subr.mxu0 %v136
  %350 = vmatpush2.msra.mxu0 %v135
  %351 = vmatprep.subr.mxu0 %v134
  %352 = vmatpush2.msra.mxu0 %v133
  %353 = vmatprep.subr.mxu0 %v132
  %354 = vmatpush2.msra.mxu0 %v131
  %355 = vmatprep.subr.mxu0 %v130
  %356 = vmatpush2.msra.mxu0 %v129
  %357 = vmatprep.subr.mxu0 %v128
  %358 = vmatpush2.msra.mxu0 %v127
  %359 = vmatprep.subr.mxu0 %v126
  %360 = vmatpush2.msra.mxu0 %v125
  %361 = vmatprep.subr.mxu0 %v124
  %362 = vmatpush2.msra.mxu0 %v123
  %363 = vmatprep.subr.mxu0 %v122
  %364 = vmatpush2.msra.mxu0 %v121
  %365 = vmatprep.subr.mxu0 %v120
  %366 = vmatpush2.msra.mxu0 %v119
  %367 = vmatprep.subr.mxu0 %v118
  %368 = vmatpush2.msra.mxu0 %v117
  %369 = vmatprep.mubr.f32.mxu0 %v304
  %370 = vmatmul.mubr.f32.gmra.mxu0 %v303
  %v371 = vpop.f32.mrf.mxu0
  %v372 = vadd.f32 0.0, %v371
  %v373 = vpop.f32.mrf.mxu0
  %v374 = vadd.f32 0.0, %v373
  %375 = vdwg.mxu0
  %v376 = vmul.f32 %v299, %v299
  %v377 = vmul.f32 %v301, %v301
  %v378 = vsub.f32 %v372, %v376
  %v379 = vsub.f32 %v374, %v377
  %v380 = vsub.f32 %v228, %v299
  %v381 = vsub.f32 %v230, %v301
  %v382 = vadd.f32 %v378, 1e-05
  %v383 = vadd.f32 %v379, 1e-05
  %v384 = vrsqrt.pop %v382
  %v385 = vrsqrt.pop %v383
  %v386 = vlaneseq
  %v387 = vshrl.u32 %v386, 7
  %v388 = vsub.s32 2, %v387
  %v389 = vrot.slane %v149, %v388
  %v390 = vlaneseq
  %v391 = vshrl.u32 %v390, 7
  %v392 = vsub.s32 2, %v391
  %v393 = vrot.slane %v150, %v392
  %v394 = vmul.f32 %v384, %v389
  %v395 = vmul.f32 %v385, %v393
  %v396 = vmul.f32 %v380, %v394
  %v397 = vmul.f32 %v381, %v395
  %v398 = vlaneseq
  %v399 = vshrl.u32 %v398, 7
  %v400 = vsub.s32 3, %v399
  %v401 = vrot.slane %v149, %v400
  %v402 = vlaneseq
  %v403 = vshrl.u32 %v402, 7
  %v404 = vsub.s32 3, %v403
  %v405 = vrot.slane %v150, %v404
  %v406 = vadd.f32 %v396, %v401
  %v407 = vadd.f32 %v397, %v405
  %v408 = vmax.f32 %v406, 0.0
  %v409 = vmax.f32 %v407, 0.0
  %v410 = vld [vmem:[%s2] sm:$0xff]
  %v411 = vld [vmem:[%s2 + $0x8] sm:$0xff]
  %v412 = vld [vmem:[%s2 + $0x10] sm:$0xff]
  %v413 = vld [vmem:[%s2 + $0x18] sm:$0xff]
  %v414 = vld [vmem:[%s2 + $0x20] sm:$0xff]
  %v415 = vld [vmem:[%s2 + $0x28] sm:$0xff]
  %v416 = vld [vmem:[%s2 + $0x30] sm:$0xff]
  %v417 = vld [vmem:[%s2 + $0x38] sm:$0xff]
  %v418 = vld [vmem:[%s2 + $0x40] sm:$0xff]
  %v419 = vld [vmem:[%s2 + $0x48] sm:$0xff]
  %v420 = vld [vmem:[%s2 + $0x50] sm:$0xff]
  %v421 = vld [vmem:[%s2 + $0x58] sm:$0xff]
  %v422 = vld [vmem:[%s2 + $0x60] sm:$0xff]
  %v423 = vld [vmem:[%s2 + $0x68] sm:$0xff]
  %v424 = vld [vmem:[%s2 + $0x70] sm:$0xff]
  %v425 = vld [vmem:[%s2 + $0x78] sm:$0xff]
  %v426 = vld [vmem:[%s2 + $0x80] sm:$0xff]
  %v427 = vld [vmem:[%s2 + $0x88] sm:$0xff]
  %v428 = vld [vmem:[%s2 + $0x90] sm:$0xff]
  %v429 = vld [vmem:[%s2 + $0x98] sm:$0xff]
  %v430 = vld [vmem:[%s2 + $0xa0] sm:$0xff]
  %v431 = vld [vmem:[%s2 + $0xa8] sm:$0xff]
  %v432 = vld [vmem:[%s2 + $0xb0] sm:$0xff]
  %v433 = vld [vmem:[%s2 + $0xb8] sm:$0xff]
  %v434 = vld [vmem:[%s2 + $0xc0] sm:$0xff]
  %v435 = vld [vmem:[%s2 + $0xc8] sm:$0xff]
  %v436 = vld [vmem:[%s2 + $0xd0] sm:$0xff]
  %v437 = vld [vmem:[%s2 + $0xd8] sm:$0xff]
  %v438 = vld [vmem:[%s2 + $0xe0] sm:$0xff]
  %v439 = vld [vmem:[%s2 + $0xe8] sm:$0xff]
  %v440 = vld [vmem:[%s2 + $0xf0] sm:$0xff]
  %v441 = vld [vmem:[%s2 + $0xf8] sm:$0xff]
  %v442 = vld [vmem:[%s2 + $0x100] sm:$0xff]
  %v443 = vld [vmem:[%s2 + $0x108] sm:$0xff]
  %v444 = vld [vmem:[%s2 + $0x110] sm:$0xff]
  %v445 = vld [vmem:[%s2 + $0x118] sm:$0xff]
  %v446 = vld [vmem:[%s2 + $0x120] sm:$0xff]
  %v447 = vld [vmem:[%s2 + $0x128] sm:$0xff]
  %v448 = vld [vmem:[%s2 + $0x130] sm:$0xff]
  %v449 = vld [vmem:[%s2 + $0x138] sm:$0xff]
  %v450 = vld [vmem:[%s2 + $0x140] sm:$0xff]
  %v451 = vld [vmem:[%s2 + $0x148] sm:$0xff]
  %v452 = vld [vmem:[%s2 + $0x150] sm:$0xff]
  %v453 = vld [vmem:[%s2 + $0x158] sm:$0xff]
  %v454 = vld [vmem:[%s2 + $0x160] sm:$0xff]
  %v455 = vld [vmem:[%s2 + $0x168] sm:$0xff]
  %v456 = vld [vmem:[%s2 + $0x170] sm:$0xff]
  %v457 = vld [vmem:[%s2 + $0x178] sm:$0xff]
  %v458 = vld [vmem:[%s2 + $0x180] sm:$0xff]
  %v459 = vld [vmem:[%s2 + $0x188] sm:$0xff]
  %v460 = vld [vmem:[%s2 + $0x190] sm:$0xff]
  %v461 = vld [vmem:[%s2 + $0x198] sm:$0xff]
  %v462 = vld [vmem:[%s2 + $0x1a0] sm:$0xff]
  %v463 = vld [vmem:[%s2 + $0x1a8] sm:$0xff]
  %v464 = vld [vmem:[%s2 + $0x1b0] sm:$0xff]
  %v465 = vld [vmem:[%s2 + $0x1b8] sm:$0xff]
  %v466 = vld [vmem:[%s2 + $0x1c0] sm:$0xff]
  %v467 = vld [vmem:[%s2 + $0x1c8] sm:$0xff]
  %v468 = vld [vmem:[%s2 + $0x1d0] sm:$0xff]
  %v469 = vld [vmem:[%s2 + $0x1d8] sm:$0xff]
  %v470 = vld [vmem:[%s2 + $0x1e0] sm:$0xff]
  %v471 = vld [vmem:[%s2 + $0x1e8] sm:$0xff]
  %v472 = vld [vmem:[%s2 + $0x1f0] sm:$0xff]
  %v473 = vld [vmem:[%s2 + $0x1f8] sm:$0xff]
  %v474 = vlaneseq
  %v475 = vshrl.u32 %v474, 7
  %v476 = vsub.s32 1, %v475
  %v477 = vrot.slane %v149, %v476
  %v478 = vlaneseq
  %v479 = vshrl.u32 %v478, 7
  %v480 = vsub.s32 1, %v479
  %v481 = vrot.slane %v150, %v480
  %482 = vmatprep.subr.mxu0 %v441
  %483 = vmatpush1.msra.mxu0 %v440
  %484 = vmatprep.subr.mxu0 %v439
  %485 = vmatpush1.msra.mxu0 %v438
  %486 = vmatprep.subr.mxu0 %v437
  %487 = vmatpush1.msra.mxu0 %v436
  %488 = vmatprep.subr.mxu0 %v435
  %489 = vmatpush1.msra.mxu0 %v434
  %490 = vmatprep.subr.mxu0 %v433
  %491 = vmatpush1.msra.mxu0 %v432
  %492 = vmatprep.subr.mxu0 %v431
  %493 = vmatpush1.msra.mxu0 %v430
  %494 = vmatprep.subr.mxu0 %v429
  %495 = vmatpush1.msra.mxu0 %v428
  %496 = vmatprep.subr.mxu0 %v427
  %497 = vmatpush1.msra.mxu0 %v426
  %498 = vmatprep.subr.mxu0 %v425
  %499 = vmatpush1.msra.mxu0 %v424
  %500 = vmatprep.subr.mxu0 %v423
  %501 = vmatpush1.msra.mxu0 %v422
  %502 = vmatprep.subr.mxu0 %v421
  %503 = vmatpush1.msra.mxu0 %v420
  %504 = vmatprep.subr.mxu0 %v419
  %505 = vmatpush1.msra.mxu0 %v418
  %506 = vmatprep.subr.mxu0 %v417
  %507 = vmatpush1.msra.mxu0 %v416
  %508 = vmatprep.subr.mxu0 %v415
  %509 = vmatpush1.msra.mxu0 %v414
  %510 = vmatprep.subr.mxu0 %v413
  %511 = vmatpush1.msra.mxu0 %v412
  %512 = vmatprep.subr.mxu0 %v411
  %513 = vmatpush1.msra.mxu0 %v410
  %514 = vmatprep.subr.mxu0 %v473
  %515 = vmatpush2.msra.mxu0 %v472
  %516 = vmatprep.subr.mxu0 %v471
  %517 = vmatpush2.msra.mxu0 %v470
  %518 = vmatprep.subr.mxu0 %v469
  %519 = vmatpush2.msra.mxu0 %v468
  %520 = vmatprep.subr.mxu0 %v467
  %521 = vmatpush2.msra.mxu0 %v466
  %522 = vmatprep.subr.mxu0 %v465
  %523 = vmatpush2.msra.mxu0 %v464
  %524 = vmatprep.subr.mxu0 %v463
  %525 = vmatpush2.msra.mxu0 %v462
  %526 = vmatprep.subr.mxu0 %v461
  %527 = vmatpush2.msra.mxu0 %v460
  %528 = vmatprep.subr.mxu0 %v459
  %529 = vmatpush2.msra.mxu0 %v458
  %530 = vmatprep.subr.mxu0 %v457
  %531 = vmatpush2.msra.mxu0 %v456
  %532 = vmatprep.subr.mxu0 %v455
  %533 = vmatpush2.msra.mxu0 %v454
  %534 = vmatprep.subr.mxu0 %v453
  %535 = vmatpush2.msra.mxu0 %v452
  %536 = vmatprep.subr.mxu0 %v451
  %537 = vmatpush2.msra.mxu0 %v450
  %538 = vmatprep.subr.mxu0 %v449
  %539 = vmatpush2.msra.mxu0 %v448
  %540 = vmatprep.subr.mxu0 %v447
  %541 = vmatpush2.msra.mxu0 %v446
  %542 = vmatprep.subr.mxu0 %v445
  %543 = vmatpush2.msra.mxu0 %v444
  %544 = vmatprep.subr.mxu0 %v443
  %545 = vmatpush2.msra.mxu0 %v442
  %546 = vmatprep.mubr.f32.mxu0 %v409
  %547 = vmatmul.mubr.f32.gmra.mxu0 %v408
  %v548 = vpop.f32.mrf.mxu0
  %v549 = vadd.f32 %v477, %v548
  %v550 = vpop.f32.mrf.mxu0
  %v551 = vadd.f32 %v481, %v550
  %552 = vdwg.mxu0
  %553 = vmatprep.subr.mxu0 %v116
  %554 = vmatpush1.msra.mxu0 %v115
  %555 = vmatprep.subr.mxu0 %v114
  %556 = vmatpush1.msra.mxu0 %v113
  %557 = vmatprep.subr.mxu0 %v112
  %558 = vmatpush1.msra.mxu0 %v111
  %559 = vmatprep.subr.mxu0 %v110
  %560 = vmatpush1.msra.mxu0 %v109
  %561 = vmatprep.subr.mxu0 %v108
  %562 = vmatpush1.msra.mxu0 %v107
  %563 = vmatprep.subr.mxu0 %v106
  %564 = vmatpush1.msra.mxu0 %v105
  %565 = vmatprep.subr.mxu0 %v104
  %566 = vmatpush1.msra.mxu0 %v103
  %567 = vmatprep.subr.mxu0 %v102
  %568 = vmatpush1.msra.mxu0 %v101
  %569 = vmatprep.subr.mxu0 %v100
  %570 = vmatpush1.msra.mxu0 %v99
  %571 = vmatprep.subr.mxu0 %v98
  %572 = vmatpush1.msra.mxu0 %v97
  %573 = vmatprep.subr.mxu0 %v96
  %574 = vmatpush1.msra.mxu0 %v95
  %575 = vmatprep.subr.mxu0 %v94
  %576 = vmatpush1.msra.mxu0 %v93
  %577 = vmatprep.subr.mxu0 %v92
  %578 = vmatpush1.msra.mxu0 %v91
  %579 = vmatprep.subr.mxu0 %v90
  %580 = vmatpush1.msra.mxu0 %v89
  %581 = vmatprep.subr.mxu0 %v88
  %582 = vmatpush1.msra.mxu0 %v87
  %583 = vmatprep.subr.mxu0 %v86
  %584 = vmatpush1.msra.mxu0 %v85
  %585 = vmatprep.subr.mxu0 %v148
  %586 = vmatpush2.msra.mxu0 %v147
  %587 = vmatprep.subr.mxu0 %v146
  %588 = vmatpush2.msra.mxu0 %v145
  %589 = vmatprep.subr.mxu0 %v144
  %590 = vmatpush2.msra.mxu0 %v143
  %591 = vmatprep.subr.mxu0 %v142
  %592 = vmatpush2.msra.mxu0 %v141
  %593 = vmatprep.subr.mxu0 %v140
  %594 = vmatpush2.msra.mxu0 %v139
  %595 = vmatprep.subr.mxu0 %v138
  %596 = vmatpush2.msra.mxu0 %v137
  %597 = vmatprep.subr.mxu0 %v136
  %598 = vmatpush2.msra.mxu0 %v135
  %599 = vmatprep.subr.mxu0 %v134
  %600 = vmatpush2.msra.mxu0 %v133
  %601 = vmatprep.subr.mxu0 %v132
  %602 = vmatpush2.msra.mxu0 %v131
  %603 = vmatprep.subr.mxu0 %v130
  %604 = vmatpush2.msra.mxu0 %v129
  %605 = vmatprep.subr.mxu0 %v128
  %606 = vmatpush2.msra.mxu0 %v127
  %607 = vmatprep.subr.mxu0 %v126
  %608 = vmatpush2.msra.mxu0 %v125
  %609 = vmatprep.subr.mxu0 %v124
  %610 = vmatpush2.msra.mxu0 %v123
  %611 = vmatprep.subr.mxu0 %v122
  %612 = vmatpush2.msra.mxu0 %v121
  %613 = vmatprep.subr.mxu0 %v120
  %614 = vmatpush2.msra.mxu0 %v119
  %615 = vmatprep.subr.mxu0 %v118
  %616 = vmatpush2.msra.mxu0 %v117
  %617 = vmatprep.mubr.f32.mxu0 %v551
  %618 = vmatmul.mubr.f32.gmra.mxu0 %v549
  %v619 = vpop.f32.mrf.mxu0
  %v620 = vadd.f32 0.0, %v619
  %v621 = vpop.f32.mrf.mxu0
  %v622 = vadd.f32 0.0, %v621
  %623 = vdwg.mxu0
  %v624 = vmul.f32 %v549, %v549
  %v625 = vmul.f32 %v551, %v551
  %626 = vmatprep.subr.mxu0 %v116
  %627 = vmatpush1.msra.mxu0 %v115
  %628 = vmatprep.subr.mxu0 %v114
  %629 = vmatpush1.msra.mxu0 %v113
  %630 = vmatprep.subr.mxu0 %v112
  %631 = vmatpush1.msra.mxu0 %v111
  %632 = vmatprep.subr.mxu0 %v110
  %633 = vmatpush1.msra.mxu0 %v109
  %634 = vmatprep.subr.mxu0 %v108
  %635 = vmatpush1.msra.mxu0 %v107
  %636 = vmatprep.subr.mxu0 %v106
  %637 = vmatpush1.msra.mxu0 %v105
  %638 = vmatprep.subr.mxu0 %v104
  %639 = vmatpush1.msra.mxu0 %v103
  %640 = vmatprep.subr.mxu0 %v102
  %641 = vmatpush1.msra.mxu0 %v101
  %642 = vmatprep.subr.mxu0 %v100
  %643 = vmatpush1.msra.mxu0 %v99
  %644 = vmatprep.subr.mxu0 %v98
  %645 = vmatpush1.msra.mxu0 %v97
  %646 = vmatprep.subr.mxu0 %v96
  %647 = vmatpush1.msra.mxu0 %v95
  %648 = vmatprep.subr.mxu0 %v94
  %649 = vmatpush1.msra.mxu0 %v93
  %650 = vmatprep.subr.mxu0 %v92
  %651 = vmatpush1.msra.mxu0 %v91
  %652 = vmatprep.subr.mxu0 %v90
  %653 = vmatpush1.msra.mxu0 %v89
  %654 = vmatprep.subr.mxu0 %v88
  %655 = vmatpush1.msra.mxu0 %v87
  %656 = vmatprep.subr.mxu0 %v86
  %657 = vmatpush1.msra.mxu0 %v85
  %658 = vmatprep.subr.mxu0 %v148
  %659 = vmatpush2.msra.mxu0 %v147
  %660 = vmatprep.subr.mxu0 %v146
  %661 = vmatpush2.msra.mxu0 %v145
  %662 = vmatprep.subr.mxu0 %v144
  %663 = vmatpush2.msra.mxu0 %v143
  %664 = vmatprep.subr.mxu0 %v142
  %665 = vmatpush2.msra.mxu0 %v141
  %666 = vmatprep.subr.mxu0 %v140
  %667 = vmatpush2.msra.mxu0 %v139
  %668 = vmatprep.subr.mxu0 %v138
  %669 = vmatpush2.msra.mxu0 %v137
  %670 = vmatprep.subr.mxu0 %v136
  %671 = vmatpush2.msra.mxu0 %v135
  %672 = vmatprep.subr.mxu0 %v134
  %673 = vmatpush2.msra.mxu0 %v133
  %674 = vmatprep.subr.mxu0 %v132
  %675 = vmatpush2.msra.mxu0 %v131
  %676 = vmatprep.subr.mxu0 %v130
  %677 = vmatpush2.msra.mxu0 %v129
  %678 = vmatprep.subr.mxu0 %v128
  %679 = vmatpush2.msra.mxu0 %v127
  %680 = vmatprep.subr.mxu0 %v126
  %681 = vmatpush2.msra.mxu0 %v125
  %682 = vmatprep.subr.mxu0 %v124
  %683 = vmatpush2.msra.mxu0 %v123
  %684 = vmatprep.subr.mxu0 %v122
  %685 = vmatpush2.msra.mxu0 %v121
  %686 = vmatprep.subr.mxu0 %v120
  %687 = vmatpush2.msra.mxu0 %v119
  %688 = vmatprep.subr.mxu0 %v118
  %689 = vmatpush2.msra.mxu0 %v117
  %690 = vmatprep.mubr.f32.mxu0 %v625
  %691 = vmatmul.mubr.f32.gmra.mxu0 %v624
  %v692 = vpop.f32.mrf.mxu0
  %v693 = vadd.f32 0.0, %v692
  %v694 = vpop.f32.mrf.mxu0
  %v695 = vadd.f32 0.0, %v694
  %696 = vdwg.mxu0
  %v697 = vmul.f32 %v620, %v620
  %v698 = vmul.f32 %v622, %v622
  %v699 = vsub.f32 %v693, %v697
  %v700 = vsub.f32 %v695, %v698
  %v701 = vsub.f32 %v549, %v620
  %v702 = vsub.f32 %v551, %v622
  %v703 = vadd.f32 %v699, 1e-05
  %v704 = vadd.f32 %v700, 1e-05
  %v705 = vrsqrt.pop %v703
  %v706 = vrsqrt.pop %v704
  %v707 = vlaneseq
  %v708 = vshrl.u32 %v707, 7
  %v709 = vsub.s32 4, %v708
  %v710 = vrot.slane %v149, %v709
  %v711 = vlaneseq
  %v712 = vshrl.u32 %v711, 7
  %v713 = vsub.s32 4, %v712
  %v714 = vrot.slane %v150, %v713
  %v715 = vmul.f32 %v705, %v710
  %v716 = vmul.f32 %v706, %v714
  %v717 = vmul.f32 %v701, %v715
  %v718 = vmul.f32 %v702, %v716
  %v719 = vlaneseq
  %v720 = vshrl.u32 %v719, 7
  %v721 = vsub.s32 5, %v720
  %v722 = vrot.slane %v149, %v721
  %v723 = vlaneseq
  %v724 = vshrl.u32 %v723, 7
  %v725 = vsub.s32 5, %v724
  %v726 = vrot.slane %v150, %v725
  %v727 = vadd.f32 %v717, %v722
  %v728 = vadd.f32 %v718, %v726
  %v729 = vmax.f32 %v727, 0.0
  %v730 = vmax.f32 %v728, 0.0
  %v731 = vlaneseq
  %v732 = vshrl.u32 %v731, 7
  %v733 = vsub.s32 0, %v732
  %v734 = vrot.slane %v149, %v733
  %v735 = vlaneseq
  %v736 = vshrl.u32 %v735, 7
  %v737 = vsub.s32 0, %v736
  %v738 = vrot.slane %v150, %v737
  %739 = vmatprep.subr.mxu0 %v82
  %740 = vmatpush1.msra.mxu0 %v81
  %741 = vmatprep.subr.mxu0 %v78
  %742 = vmatpush1.msra.mxu0 %v77
  %743 = vmatprep.subr.mxu0 %v74
  %744 = vmatpush1.msra.mxu0 %v73
  %745 = vmatprep.subr.mxu0 %v70
  %746 = vmatpush1.msra.mxu0 %v69
  %747 = vmatprep.subr.mxu0 %v66
  %748 = vmatpush1.msra.mxu0 %v65
  %749 = vmatprep.subr.mxu0 %v62
  %750 = vmatpush1.msra.mxu0 %v61
  %751 = vmatprep.subr.mxu0 %v58
  %752 = vmatpush1.msra.mxu0 %v57
  %753 = vmatprep.subr.mxu0 %v54
  %754 = vmatpush1.msra.mxu0 %v53
  %755 = vmatprep.subr.mxu0 %v50
  %756 = vmatpush1.msra.mxu0 %v49
  %757 = vmatprep.subr.mxu0 %v46
  %758 = vmatpush1.msra.mxu0 %v45
  %759 = vmatprep.subr.mxu0 %v42
  %760 = vmatpush1.msra.mxu0 %v41
  %761 = vmatprep.subr.mxu0 %v38
  %762 = vmatpush1.msra.mxu0 %v37
  %763 = vmatprep.subr.mxu0 %v34
  %764 = vmatpush1.msra.mxu0 %v33
  %765 = vmatprep.subr.mxu0 %v30
  %766 = vmatpush1.msra.mxu0 %v29
  %767 = vmatprep.subr.mxu0 %v26
  %768 = vmatpush1.msra.mxu0 %v25
  %769 = vmatprep.subr.mxu0 %v22
  %770 = vmatpush1.msra.mxu0 %v21
  %771 = vmatprep.subr.mxu0 0.0
  %772 = vmatpush2.msra.mxu0 0.0
  %773 = vmatprep.subr.mxu0 0.0
  %774 = vmatpush2.msra.mxu0 0.0
  %775 = vmatprep.subr.mxu0 0.0
  %776 = vmatpush2.msra.mxu0 0.0
  %777 = vmatprep.subr.mxu0 0.0
  %778 = vmatpush2.msra.mxu0 0.0
  %779 = vmatprep.subr.mxu0 0.0
  %780 = vmatpush2.msra.mxu0 0.0
  %781 = vmatprep.subr.mxu0 0.0
  %782 = vmatpush2.msra.mxu0 0.0
  %783 = vmatprep.subr.mxu0 0.0
  %784 = vmatpush2.msra.mxu0 0.0
  %785 = vmatprep.subr.mxu0 0.0
  %786 = vmatpush2.msra.mxu0 0.0
  %787 = vmatprep.subr.mxu0 0.0
  %788 = vmatpush2.msra.mxu0 0.0
  %789 = vmatprep.subr.mxu0 0.0
  %790 = vmatpush2.msra.mxu0 0.0
  %791 = vmatprep.subr.mxu0 0.0
  %792 = vmatpush2.msra.mxu0 0.0
  %793 = vmatprep.subr.mxu0 0.0
  %794 = vmatpush2.msra.mxu0 0.0
  %795 = vmatprep.subr.mxu0 0.0
  %796 = vmatpush2.msra.mxu0 0.0
  %797 = vmatprep.subr.mxu0 0.0
  %798 = vmatpush2.msra.mxu0 0.0
  %799 = vmatprep.subr.mxu0 0.0
  %800 = vmatpush2.msra.mxu0 0.0
  %801 = vmatprep.subr.mxu0 0.0
  %802 = vmatpush2.msra.mxu0 0.0
  %803 = vmatprep.mubr.f32.mxu0 0.0
  %804 = vmatmul.mubr.f32.gmra.mxu0 %v20
  %v805 = vpop.f32.mrf.mxu0
  %v806 = vadd.f32 %v734, %v805
  %v807 = vpop.f32.mrf.mxu0
  %v808 = vadd.f32 %v738, %v807
  %809 = vdwg.mxu0
  %v810 = vadd.f32 %v729, %v806
  %v811 = vadd.f32 %v730, %v808
  %812 = vst [vmem:[%s5] sm:$0xff] %v810
  %813 = vst [vmem:[%s5 + $0x8] sm:$0xff] %v811
  // Predicated region
  $region22: #{residual_block.1} parent=0 // pred_check
    _
  $region23: #{residual_block.1} parent=0 // pred_check_branch
    %815 = sbr.rel (0) target = $region25
  $region24: #{residual_block.1} parent=0 // pred_region
    _
  $region25: #{residual_block.1} parent=0 // pred_fallthru
    _
  // Predicated region
  $region26: #{residual_block.1} parent=0 // pred_check
    _
  $region27: #{residual_block.1} parent=0 // pred_check_branch
    %817 = sbr.rel (0) target = $region29
  $region28: #{residual_block.1} parent=0 // pred_region
    _
  $region29: #{residual_block.1} parent=0 // pred_fallthru
    _

</llo_original>
